<compile_context>
chip_gen: v7x
topology: tpu7x:2x2x1
jax: 0.10.0
libtpu: 0.0.40
codegen_flags: <defaults>
</compile_context>

<pallas_src>
import functools

import jax
import jax.numpy as jnp
from jax.experimental import pallas as pl
from jax.experimental.pallas import tpu as pltpu

_EPS = 1e-5  # nn.LayerNorm default


def _patch_merge_kernel(x_ref, gamma_ref, beta_ref, w_ref, o_ref, xn_ref):
    """LayerNorm(4C) once per row tile (into scratch); (4C -> tn) MXU per step."""

    @pl.when(pl.program_id(1) == 0)
    def _():
        x = x_ref[...].astype(jnp.float32)                    # (TM, 4C)
        mean = jnp.mean(x, axis=-1, keepdims=True)
        xc = x - mean
        var = jnp.mean(xc * xc, axis=-1, keepdims=True)
        inv = jax.lax.rsqrt(var + _EPS)
        # gamma/beta arrive pre-cast to f32 from the wrapper (no per-tile casts).
        xn = xc * (inv * gamma_ref[...]) + beta_ref[...]
        # Scratch dtype == weight dtype -> bf16 MXU fast path for bf16 models.
        xn_ref[...] = xn.astype(xn_ref.dtype)

    o_ref[...] = jnp.dot(
        xn_ref[...], w_ref[...], preferred_element_type=jnp.float32
    ).astype(o_ref.dtype)


def _round_up(v, m):
    return ((v + m - 1) // m) * m


def _vmem_budget_and_limit():
    """Generation-aware VMEM budget/limit (fallback assumes a 64 MiB part)."""
    try:
        cap = int(pltpu.get_tpu_info().vmem_capacity_bytes)
    except Exception:
        cap = 64 * 1024 * 1024
    cap = max(cap, 64 * 1024 * 1024)
    budget = cap // 2                                   # accounted buffer budget
    limit = min((cap * 3) // 4, cap - 16 * 1024 * 1024)  # headroom for Mosaic
    return budget, limit


def _choose_col_tile(coutp, block_cols):
    """Output-feature tile: lane-dense multiple of 128, capped near 512."""
    if block_cols is not None:
        return max(128, _round_up(min(block_cols, coutp), 128))
    if coutp <= 512:
        return coutp
    for cand in (512, 384, 256):
        if coutp % cand == 0:
            return cand
    return 128


def _choose_row_tile(n_rows, c4, tn, in_bytes, out_bytes, w_bytes, xn_bytes,
                     block_rows, budget, row_align):
    """Largest row tile whose double-buffered working set fits the budget."""
    fixed = (2 * c4 * tn * w_bytes          # weight column tile, double buffered
             + 2 * 2 * c4 * 4)              # gamma + beta (f32), double buffered
    per_row = (2 * c4 * in_bytes            # x tile, double buffered
               + 2 * tn * out_bytes         # output tile, double buffered
               + c4 * xn_bytes              # LN scratch (single buffer)
               + 3 * c4 * 4                 # ~3 live f32 LN temporaries
               + tn * 4)                    # f32 dot result before downcast
    tm = max(row_align, (budget - fixed) // per_row)
    tm = min(tm, block_rows, _round_up(n_rows, row_align))
    # Prefer >= 8 row-axis grid steps (>= 4 per v7x TensorCore) so DMA and
    # writeback overlap compute, but never shrink below 256 rows (or the
    # whole problem) just to get more steps.
    step_cap = max(min(256, _round_up(n_rows, row_align)),
                   _round_up(pl.cdiv(n_rows, 8), row_align))
    tm = min(tm, step_cap)
    if tm >= 128:
        tm = (tm // 128) * 128
    else:
        tm = _round_up(tm, row_align)
    return int(tm)


@functools.partial(jax.jit,
                   static_argnames=("block_rows", "block_cols", "out_layout"))
def patch_merging(x, gamma, beta, w_t, *, block_rows=1024, block_cols=None,
                  out_layout="nchw"):
    """Forward pass of PatchMerging.

    Args:
      x:     (B, C, H, W)  NCHW input (matches the PyTorch module).
      gamma: (4C,)         LayerNorm weight.
      beta:  (4C,)         LayerNorm bias.
      w_t:   (4C, Cout)    reduction weight, already transposed (== W.T).
      out_layout: "nchw" (default, PyTorch-equivalent), "nhwc", or "tokens".

    Returns:
      (B, Cout, ceil(H/2), ceil(W/2)) for "nchw".
    """
    B, C, H, W = x.shape
    pad_h = (2 - H % 2) % 2
    pad_w = (2 - W % 2) % 2
    if pad_h or pad_w:
        x = jnp.pad(x, ((0, 0), (0, 0), (0, pad_h), (0, pad_w)))
    Hp, Wp = H + pad_h, W + pad_w
    H2, W2 = Hp // 2, Wp // 2
    C4 = 4 * C
    Cout = w_t.shape[1]

    # One fused XLA copy builds the (N, 4C) row matrix directly from NCHW.
    # Channel order matches torch.cat([x0, x1, x2, x3], -1):
    #   feature = dh * 2C + dw * C + c  with (dh, dw) the 2x2 window offset.
    xg = x.reshape(B, C, H2, 2, W2, 2)
    xg = jnp.transpose(xg, (0, 2, 4, 3, 5, 1))               # (B, H2, W2, 2, 2, C)
    N = B * H2 * W2
    x2d = xg.reshape(N, C4)

    # Pad the output feature dim so it is a multiple of the column tile
    # (lane-dense, unmasked stores, full MXU N); padding is sliced off after.
    Coutp = _round_up(Cout, 128)
    tn = _choose_col_tile(Coutp, block_cols)
    Coutp = _round_up(Coutp, tn)
    if Coutp != Cout:
        w_t = jnp.pad(w_t, ((0, 0), (0, Coutp - Cout)))

    in_b = jnp.dtype(x.dtype).itemsize
    out_b = jnp.dtype(x.dtype).itemsize
    w_b = jnp.dtype(w_t.dtype).itemsize
    row_align = max(8, 32 // in_b)                # 8 rows f32, 16 rows bf16
    budget, vmem_limit = _vmem_budget_and_limit()
    tm = _choose_row_tile(N, C4, tn, in_b, out_b, w_b, w_b,
                          block_rows, budget, row_align)

    # Pad rows so the grid divides evenly.  Padded rows are all-zero: var == 0
    # so rsqrt(eps) gives large-but-FINITE values that feed the matmul and are
    # sliced off afterwards -- intentionally not a NaN path, do not "fix".
    n_pad = (-N) % tm
    if n_pad:
        x2d = jnp.pad(x2d, ((0, n_pad), (0, 0)))
    Np = x2d.shape[0]

    # Hoist param casts out of the per-tile body.
    gamma2d = gamma.astype(jnp.float32).reshape(1, C4)
    beta2d = beta.astype(jnp.float32).reshape(1, C4)

    out2d = pl.pallas_call(
        _patch_merge_kernel,
        out_shape=jax.ShapeDtypeStruct((Np, Coutp), x.dtype),
        grid_spec=pltpu.PrefetchScalarGridSpec(
            num_scalar_prefetch=0,
            grid=(Np // tm, Coutp // tn),
            in_specs=[
                pl.BlockSpec((tm, C4), lambda i, j: (i, 0)),   # x rows (kept over j)
                pl.BlockSpec((1, C4), lambda i, j: (0, 0)),    # gamma (f32)
                pl.BlockSpec((1, C4), lambda i, j: (0, 0)),    # beta  (f32)
                pl.BlockSpec((C4, tn), lambda i, j: (0, j)),   # weight^T column tile
            ],
            out_specs=pl.BlockSpec((tm, tn), lambda i, j: (i, j)),
            scratch_shapes=[pltpu.VMEM((tm, C4), w_t.dtype)],  # normalized rows
        ),
        compiler_params=pltpu.CompilerParams(
            dimension_semantics=("parallel", "arbitrary"),
            vmem_limit_bytes=int(vmem_limit),
            # Let XLA fuse the 2x2 gather/concat producer into the x input
            # instead of materializing x2d in HBM (advisory hint).
            allow_input_fusion=[True, False, False, False],
        ),
    )(x2d, gamma2d, beta2d, w_t)

    out_tok = out2d[:N, :Cout]
    if out_layout == "tokens":
        return out_tok                                         # (B*H2*W2, Cout)
    out = out_tok.reshape(B, H2, W2, Cout)
    if out_layout == "nhwc":
        return out
    # Default: NCHW, matching the PyTorch module's forward.
    return jnp.transpose(out, (0, 3, 1, 2))


def _reference(x, gamma, beta, w_t):
    """Pure-JAX reference mirroring the PyTorch forward (independent path)."""
    B, C, H, W = x.shape
    pad_h = (2 - H % 2) % 2
    pad_w = (2 - W % 2) % 2
    if pad_h or pad_w:
        x = jnp.pad(x, ((0, 0), (0, 0), (0, pad_h), (0, pad_w)))
    xh = jnp.transpose(x, (0, 2, 3, 1))
    x0 = xh[:, 0::2, 0::2, :]
    x1 = xh[:, 0::2, 1::2, :]
    x2 = xh[:, 1::2, 0::2, :]
    x3 = xh[:, 1::2, 1::2, :]
    xc = jnp.concatenate([x0, x1, x2, x3], axis=-1).astype(jnp.float32)
    mean = jnp.mean(xc, axis=-1, keepdims=True)
    var = jnp.mean((xc - mean) ** 2, axis=-1, keepdims=True)
    xn = (xc - mean) * jax.lax.rsqrt(var + _EPS) * gamma.astype(jnp.float32) \
        + beta.astype(jnp.float32)
    y = xn @ w_t.astype(jnp.float32)
    return jnp.transpose(y, (0, 3, 1, 2))


if __name__ == "__main__":
    key = jax.random.PRNGKey(0)
    B, C, H, W = 2, 4, 16, 16
    out_channels = 8
    C4 = 4 * C

    k_x, k_w, k_w2 = jax.random.split(key, 3)
    x = jax.random.normal(k_x, (B, C, H, W), dtype=jnp.float32)

    # Deterministic parameter init (shapes from the module's __init__):
    #  - nn.Linear(4C, out_channels, bias=False): weight (out, 4C); we store W.T.
    #  - nn.LayerNorm(4C): weight = ones, bias = zeros (PyTorch defaults).
    bound = 1.0 / (C4 ** 0.5)
    w = jax.random.uniform(k_w, (out_channels, C4), minval=-bound, maxval=bound,
                           dtype=jnp.float32)
    w_t = w.T                                   # (4C, out_channels)
    gamma = jnp.ones((C4,), dtype=jnp.float32)
    beta = jnp.zeros((C4,), dtype=jnp.float32)

    # 1) Baseline f32, even spatial size.
    y = jax.block_until_ready(patch_merging(x, gamma, beta, w_t))
    y_ref = jax.block_until_ready(_reference(x, gamma, beta, w_t))
    assert y.shape == (B, out_channels, H // 2, W // 2), y.shape
    assert jnp.allclose(y, y_ref, atol=1e-5, rtol=1e-5), \
        float(jnp.max(jnp.abs(y - y_ref)))

    # 2) Odd spatial size exercises the pad path (H=7 -> 8, W=5 -> 6).
    x_odd = jax.random.normal(jax.random.PRNGKey(1), (B, C, 7, 5), dtype=jnp.float32)
    y_odd = jax.block_until_ready(patch_merging(x_odd, gamma, beta, w_t))
    y_odd_ref = jax.block_until_ready(_reference(x_odd, gamma, beta, w_t))
    assert y_odd.shape == (B, out_channels, 4, 3), y_odd.shape
    assert jnp.allclose(y_odd, y_odd_ref, atol=1e-5, rtol=1e-5), \
        float(jnp.max(jnp.abs(y_odd - y_odd_ref)))

    # 3) Multiple output-column tiles: Cout=200 -> padded 256, forced tn=128,
    #    exercises the j-loop + LN scratch reuse path.
    out_wide = 200
    w_wide = jax.random.uniform(k_w2, (out_wide, C4), minval=-bound, maxval=bound,
                                dtype=jnp.float32)
    y_w = jax.block_until_ready(
        patch_merging(x, gamma, beta, w_wide.T, block_cols=128))
    y_w_ref = jax.block_until_ready(_reference(x, gamma, beta, w_wide.T))
    assert y_w.shape == (B, out_wide, H // 2, W // 2), y_w.shape
    assert jnp.allclose(y_w, y_w_ref, atol=1e-5, rtol=1e-5), \
        float(jnp.max(jnp.abs(y_w - y_w_ref)))

    # 4) bf16 activations + bf16 weights (bf16 MXU path), loose tolerance for
    #    the intentional bf16 quantization of the LN output.
    x_bf = x.astype(jnp.bfloat16)
    w_t_bf = w_t.astype(jnp.bfloat16)
    y_bf = jax.block_until_ready(patch_merging(x_bf, gamma, beta, w_t_bf))
    y_bf_ref = jax.block_until_ready(_reference(x_bf, gamma, beta, w_t_bf))
    assert y_bf.dtype == jnp.bfloat16
    assert jnp.allclose(y_bf.astype(jnp.float32), y_bf_ref, atol=1e-1, rtol=0.0), \
        float(jnp.max(jnp.abs(y_bf.astype(jnp.float32) - y_bf_ref)))

    print("KERNEL_OK")
</pallas_src>

<mosaic_0001>
module attributes {stable_mosaic.version = 11 : i64} {
  func.func @_patch_merge_kernel(%arg0: i32, %arg1: i32, %arg2: memref<128x16xf32, #tpu.memory_space<vmem>>, %arg3: memref<1x16xf32, #tpu.memory_space<vmem>>, %arg4: memref<1x16xf32, #tpu.memory_space<vmem>>, %arg5: memref<16x128xf32, #tpu.memory_space<vmem>>, %arg6: memref<128x128xf32, #tpu.memory_space<vmem>>, %arg7: memref<128x16xf32, #tpu.memory_space<vmem>>) attributes {dimension_semantics = [#tpu.dimension_semantics<parallel>, #tpu.dimension_semantics<arbitrary>], iteration_bounds = array<i64: 1, 1>, scalar_prefetch = 0 : i64, scratch_operands = 1 : i64, tpu.core_type = #tpu.core_type<tc>, window_params = [{transform_indices = @transform_0, window_bounds = array<i64: 128, 16>}, {pipeline_mode = #tpu.pipeline_mode<synchronous>, transform_indices = @transform_1, window_bounds = array<i64: 1, 16>}, {pipeline_mode = #tpu.pipeline_mode<synchronous>, transform_indices = @transform_2, window_bounds = array<i64: 1, 16>}, {transform_indices = @transform_3, window_bounds = array<i64: 16, 128>}, {transform_indices = @transform_4, window_bounds = array<i64: 128, 128>}]} {
    %c0_i32 = arith.constant 0 : i32
    %0 = arith.cmpi eq, %arg1, %c0_i32 : i32
    %1 = arith.extui %0 : i1 to i32
    %c0_i32_0 = arith.constant 0 : i32
    %2 = arith.cmpi ne, %1, %c0_i32_0 : i32
    scf.if %2 {
      %c0_6 = arith.constant 0 : index
      %c0_7 = arith.constant 0 : index
      %7 = vector.load %arg2[%c0_6, %c0_7] : memref<128x16xf32, #tpu.memory_space<vmem>>, vector<128x16xf32>
      %cst_8 = arith.constant dense<0.000000e+00> : vector<128xf32>
      %8 = vector.multi_reduction <add>, %7, %cst_8 [1] : vector<128x16xf32> to vector<128xf32>
      %9 = vector.shape_cast %8 : vector<128xf32> to vector<128x1xf32>
      %cst_9 = arith.constant 1.600000e+01 : f32
      %10 = vector.broadcast %cst_9 : f32 to vector<128x1xf32>
      %11 = arith.divf %9, %10 : vector<128x1xf32>
      %12 = vector.broadcast %11 : vector<128x1xf32> to vector<128x16xf32>
      %13 = arith.subf %7, %12 : vector<128x16xf32>
      %14 = arith.mulf %13, %13 : vector<128x16xf32>
      %cst_10 = arith.constant dense<0.000000e+00> : vector<128xf32>
      %15 = vector.multi_reduction <add>, %14, %cst_10 [1] : vector<128x16xf32> to vector<128xf32>
      %16 = vector.shape_cast %15 : vector<128xf32> to vector<128x1xf32>
      %cst_11 = arith.constant 1.600000e+01 : f32
      %17 = vector.broadcast %cst_11 : f32 to vector<128x1xf32>
      %18 = arith.divf %16, %17 : vector<128x1xf32>
      %cst_12 = arith.constant 9.99999974E-6 : f32
      %19 = vector.broadcast %cst_12 : f32 to vector<128x1xf32>
      %20 = arith.addf %18, %19 : vector<128x1xf32>
      %21 = math.rsqrt %20 : vector<128x1xf32>
      %c0_13 = arith.constant 0 : index
      %c0_14 = arith.constant 0 : index
      %22 = vector.load %arg3[%c0_13, %c0_14] : memref<1x16xf32, #tpu.memory_space<vmem>>, vector<1x16xf32>
      %23 = vector.broadcast %21 : vector<128x1xf32> to vector<128x16xf32>
      %24 = vector.broadcast %22 : vector<1x16xf32> to vector<128x16xf32>
      %25 = arith.mulf %23, %24 : vector<128x16xf32>
      %26 = arith.mulf %13, %25 : vector<128x16xf32>
      %c0_15 = arith.constant 0 : index
      %c0_16 = arith.constant 0 : index
      %27 = vector.load %arg4[%c0_15, %c0_16] : memref<1x16xf32, #tpu.memory_space<vmem>>, vector<1x16xf32>
      %28 = vector.broadcast %27 : vector<1x16xf32> to vector<128x16xf32>
      %29 = arith.addf %26, %28 : vector<128x16xf32>
      %c0_17 = arith.constant 0 : index
      %c0_18 = arith.constant 0 : index
      %30 = vector.load %arg7[%c0_17, %c0_18] : memref<128x16xf32, #tpu.memory_space<vmem>>, vector<128x16xf32>
      tpu.vector_store %arg7[%c0_17, %c0_18], %29 {strides = array<i32>} : memref<128x16xf32, #tpu.memory_space<vmem>>, vector<128x16xf32>,
    } else {
    }
    %c0 = arith.constant 0 : index
    %c0_1 = arith.constant 0 : index
    %3 = vector.load %arg7[%c0, %c0_1] : memref<128x16xf32, #tpu.memory_space<vmem>>, vector<128x16xf32>
    %c0_2 = arith.constant 0 : index
    %c0_3 = arith.constant 0 : index
    %4 = vector.load %arg5[%c0_2, %c0_3] : memref<16x128xf32, #tpu.memory_space<vmem>>, vector<16x128xf32>
    %cst = arith.constant dense<0.000000e+00> : vector<128x128xf32>
    %5 = tpu.matmul %3, %4, %cst {dimension_numbers = #tpu.dot_dimension_numbers<[1], [0], [0], [1], [0, 0, 1, 1], [], []>} : vector<128x16xf32>, vector<16x128xf32>, vector<128x128xf32> -> vector<128x128xf32>
    %c0_4 = arith.constant 0 : index
    %c0_5 = arith.constant 0 : index
    %6 = vector.load %arg6[%c0_4, %c0_5] : memref<128x128xf32, #tpu.memory_space<vmem>>, vector<128x128xf32>
    tpu.vector_store %arg6[%c0_4, %c0_5], %5 {strides = array<i32>} : memref<128x128xf32, #tpu.memory_space<vmem>>, vector<128x128xf32>,
    return
  }
  func.func @transform_0(%arg0: i32, %arg1: i32) -> (i32, i32) {
    %c0_i32 = arith.constant 0 : i32
    %c0_i32_0 = arith.constant 0 : i32
    return %arg0, %c0_i32 : i32, i32
  }
  func.func @transform_1(%arg0: i32, %arg1: i32) -> (i32, i32) {
    %c0_i32 = arith.constant 0 : i32
    %c0_i32_0 = arith.constant 0 : i32
    %c0_i32_1 = arith.constant 0 : i32
    return %c0_i32, %c0_i32_0 : i32, i32
  }
  func.func @transform_2(%arg0: i32, %arg1: i32) -> (i32, i32) {
    %c0_i32 = arith.constant 0 : i32
    %c0_i32_0 = arith.constant 0 : i32
    %c0_i32_1 = arith.constant 0 : i32
    return %c0_i32, %c0_i32_0 : i32, i32
  }
  func.func @transform_3(%arg0: i32, %arg1: i32) -> (i32, i32) {
    %c0_i32 = arith.constant 0 : i32
    %c0_i32_0 = arith.constant 0 : i32
    return %c0_i32, %arg1 : i32, i32
  }
  func.func @transform_4(%arg0: i32, %arg1: i32) -> (i32, i32) {
    %c0_i32 = arith.constant 0 : i32
    return %arg0, %arg1 : i32, i32
  }
}

</mosaic_0001>

<llo_original>
// kernel: patch_merging.1
$region0: #{patch_merging.1}
  #allocation0 [shape = 'u32[]', space=smem, size = 0x4, offset = 0x4, fixed_abs, tag = 'smem constant byte address 0x4 - core index']
  #allocation1 [shape = 'u32[144,128]{1,0:T(1,128)}', space=vmem, size = 0x12000, scoped, tag = 'internal scratch']
  #allocation2 [shape = 'f32[128,16]{1,0:T(8,128)}', space=vmem, size = 0x10000, scoped, tag = 'scratch operand']
  %s0 = inlined_call_operand.vmem [shape: f32[128,16], index: 0, kind: input, shape index: {}]
  %s1 = inlined_call_operand.vmem [shape: f32[1,16], index: 1, kind: input, shape index: {}]
  %s2 = inlined_call_operand.vmem [shape: f32[1,16], index: 2, kind: input, shape index: {}]
  %s3 = inlined_call_operand.vmem [shape: f32[16,128], index: 3, kind: input, shape index: {}]
  %s4 = inlined_call_operand.vmem [shape: f32[128,128], index: 4, kind: output, shape index: {}]
  %s5 = sld [smem:[#allocation0]]
  $region30: #{patch_merging.1} parent=0
    _
  %s7 = ssub.s32 1, %s5
  %s8 = scalar_select 0, %s7, %s5
  // Predicated region
  $region2: #{patch_merging.1} parent=0 // pred_check
    _
  $region3: #{patch_merging.1} parent=0 // pred_check_branch
    %10 = sbr.rel (0) target = $region5
  $region4: #{patch_merging.1} parent=0 // pred_region
    _
  $region5: #{patch_merging.1} parent=0 // pred_fallthru
    _
  // Predicated region
  $region6: #{patch_merging.1} parent=0 // pred_check
    _
  $region7: #{patch_merging.1} parent=0 // pred_check_branch
    %12 = sbr.rel (0) target = $region9
  $region8: #{patch_merging.1} parent=0 // pred_region
    _
  $region9: #{patch_merging.1} parent=0 // pred_fallthru
    _
  // Predicated region
  $region10: #{patch_merging.1} parent=0 // pred_check
    _
  $region11: #{patch_merging.1} parent=0 // pred_check_branch
    %14 = sbr.rel (0) target = $region13
  $region12: #{patch_merging.1} parent=0 // pred_region
    _
  $region13: #{patch_merging.1} parent=0 // pred_fallthru
    _
  // Predicated region
  $region14: #{patch_merging.1} parent=0 // pred_check
    _
  $region15: #{patch_merging.1} parent=0 // pred_check_branch
    %16 = sbr.rel (0) target = $region17
  $region16: #{patch_merging.1} parent=0 // pred_region
    _
  $region17: #{patch_merging.1} parent=0 // pred_fallthru
    _
  %p17 = scmp.eq.s32.totalorder 0, 0
  // Predicated region
  $region18: #{patch_merging.1} parent=0 // pred_check
    %p18 = pneg %p17
  $region19: #{patch_merging.1} parent=0 // pred_check_branch
    %20 = sbr.rel (%p18) target = $region21
  $region20: #{patch_merging.1} parent=0 // pred_region
    %v21 = vld [vmem:[%s0] sm:$0xff]
    %v22 = vld [vmem:[%s0 + $0x8] sm:$0xff]
    %v23 = vld [vmem:[%s0 + $0x10] sm:$0xff]
    %v24 = vld [vmem:[%s0 + $0x18] sm:$0xff]
    %v25 = vld [vmem:[%s0 + $0x20] sm:$0xff]
    %v26 = vld [vmem:[%s0 + $0x28] sm:$0xff]
    %v27 = vld [vmem:[%s0 + $0x30] sm:$0xff]
    %v28 = vld [vmem:[%s0 + $0x38] sm:$0xff]
    %v29 = vld [vmem:[%s0 + $0x40] sm:$0xff]
    %v30 = vld [vmem:[%s0 + $0x48] sm:$0xff]
    %v31 = vld [vmem:[%s0 + $0x50] sm:$0xff]
    %v32 = vld [vmem:[%s0 + $0x58] sm:$0xff]
    %v33 = vld [vmem:[%s0 + $0x60] sm:$0xff]
    %v34 = vld [vmem:[%s0 + $0x68] sm:$0xff]
    %v35 = vld [vmem:[%s0 + $0x70] sm:$0xff]
    %v36 = vld [vmem:[%s0 + $0x78] sm:$0xff]
    %vm37 = vcmask 130048
    %v38 = vsel %vm37, %v21, 0.0
    %39 = vadd.xlane.f32.xlu0 %v38
    %v40 = vpop.xlane.xlu0 %39
    %v41 = vsel %vm37, %v22, 0.0
    %42 = vadd.xlane.f32.xlu0 %v41
    %v43 = vpop.xlane.xlu0 %42
    %v44 = vsel %vm37, %v23, 0.0
    %45 = vadd.xlane.f32.xlu0 %v44
    %v46 = vpop.xlane.xlu0 %45
    %v47 = vsel %vm37, %v24, 0.0
    %48 = vadd.xlane.f32.xlu0 %v47
    %v49 = vpop.xlane.xlu0 %48
    %v50 = vsel %vm37, %v25, 0.0
    %51 = vadd.xlane.f32.xlu0 %v50
    %v52 = vpop.xlane.xlu0 %51
    %v53 = vsel %vm37, %v26, 0.0
    %54 = vadd.xlane.f32.xlu0 %v53
    %v55 = vpop.xlane.xlu0 %54
    %v56 = vsel %vm37, %v27, 0.0
    %57 = vadd.xlane.f32.xlu0 %v56
    %v58 = vpop.xlane.xlu0 %57
    %v59 = vsel %vm37, %v28, 0.0
    %60 = vadd.xlane.f32.xlu0 %v59
    %v61 = vpop.xlane.xlu0 %60
    %v62 = vsel %vm37, %v29, 0.0
    %63 = vadd.xlane.f32.xlu0 %v62
    %v64 = vpop.xlane.xlu0 %63
    %v65 = vsel %vm37, %v30, 0.0
    %66 = vadd.xlane.f32.xlu0 %v65
    %v67 = vpop.xlane.xlu0 %66
    %v68 = vsel %vm37, %v31, 0.0
    %69 = vadd.xlane.f32.xlu0 %v68
    %v70 = vpop.xlane.xlu0 %69
    %v71 = vsel %vm37, %v32, 0.0
    %72 = vadd.xlane.f32.xlu0 %v71
    %v73 = vpop.xlane.xlu0 %72
    %v74 = vsel %vm37, %v33, 0.0
    %75 = vadd.xlane.f32.xlu0 %v74
    %v76 = vpop.xlane.xlu0 %75
    %v77 = vsel %vm37, %v34, 0.0
    %78 = vadd.xlane.f32.xlu0 %v77
    %v79 = vpop.xlane.xlu0 %78
    %v80 = vsel %vm37, %v35, 0.0
    %81 = vadd.xlane.f32.xlu0 %v80
    %v82 = vpop.xlane.xlu0 %81
    %v83 = vsel %vm37, %v36, 0.0
    %84 = vadd.xlane.f32.xlu0 %v83
    %v85 = vpop.xlane.xlu0 %84
    %v86 = vrcp.pop 16.0
    %v87 = vmul.f32 %v40, %v86
    %v88 = vmul.f32 %v43, %v86
    %v89 = vmul.f32 %v46, %v86
    %v90 = vmul.f32 %v49, %v86
    %v91 = vmul.f32 %v52, %v86
    %v92 = vmul.f32 %v55, %v86
    %v93 = vmul.f32 %v58, %v86
    %v94 = vmul.f32 %v61, %v86
    %v95 = vmul.f32 %v64, %v86
    %v96 = vmul.f32 %v67, %v86
    %v97 = vmul.f32 %v70, %v86
    %v98 = vmul.f32 %v73, %v86
    %v99 = vmul.f32 %v76, %v86
    %v100 = vmul.f32 %v79, %v86
    %v101 = vmul.f32 %v82, %v86
    %v102 = vmul.f32 %v85, %v86
    %v103 = vsub.f32 %v21, %v87
    %v104 = vsub.f32 %v22, %v88
    %v105 = vsub.f32 %v23, %v89
    %v106 = vsub.f32 %v24, %v90
    %v107 = vsub.f32 %v25, %v91
    %v108 = vsub.f32 %v26, %v92
    %v109 = vsub.f32 %v27, %v93
    %v110 = vsub.f32 %v28, %v94
    %v111 = vsub.f32 %v29, %v95
    %v112 = vsub.f32 %v30, %v96
    %v113 = vsub.f32 %v31, %v97
    %v114 = vsub.f32 %v32, %v98
    %v115 = vsub.f32 %v33, %v99
    %v116 = vsub.f32 %v34, %v100
    %v117 = vsub.f32 %v35, %v101
    %v118 = vsub.f32 %v36, %v102
    %v119 = vmul.f32 %v103, %v103
    %v120 = vmul.f32 %v104, %v104
    %v121 = vmul.f32 %v105, %v105
    %v122 = vmul.f32 %v106, %v106
    %v123 = vmul.f32 %v107, %v107
    %v124 = vmul.f32 %v108, %v108
    %v125 = vmul.f32 %v109, %v109
    %v126 = vmul.f32 %v110, %v110
    %v127 = vmul.f32 %v111, %v111
    %v128 = vmul.f32 %v112, %v112
    %v129 = vmul.f32 %v113, %v113
    %v130 = vmul.f32 %v114, %v114
    %v131 = vmul.f32 %v115, %v115
    %v132 = vmul.f32 %v116, %v116
    %v133 = vmul.f32 %v117, %v117
    %v134 = vmul.f32 %v118, %v118
    %v135 = vsel %vm37, %v119, 0.0
    %136 = vadd.xlane.f32.xlu0 %v135
    %v137 = vpop.xlane.xlu0 %136
    %v138 = vsel %vm37, %v120, 0.0
    %139 = vadd.xlane.f32.xlu0 %v138
    %v140 = vpop.xlane.xlu0 %139
    %v141 = vsel %vm37, %v121, 0.0
    %142 = vadd.xlane.f32.xlu0 %v141
    %v143 = vpop.xlane.xlu0 %142
    %v144 = vsel %vm37, %v122, 0.0
    %145 = vadd.xlane.f32.xlu0 %v144
    %v146 = vpop.xlane.xlu0 %145
    %v147 = vsel %vm37, %v123, 0.0
    %148 = vadd.xlane.f32.xlu0 %v147
    %v149 = vpop.xlane.xlu0 %148
    %v150 = vsel %vm37, %v124, 0.0
    %151 = vadd.xlane.f32.xlu0 %v150
    %v152 = vpop.xlane.xlu0 %151
    %v153 = vsel %vm37, %v125, 0.0
    %154 = vadd.xlane.f32.xlu0 %v153
    %v155 = vpop.xlane.xlu0 %154
    %v156 = vsel %vm37, %v126, 0.0
    %157 = vadd.xlane.f32.xlu0 %v156
    %v158 = vpop.xlane.xlu0 %157
    %v159 = vsel %vm37, %v127, 0.0
    %160 = vadd.xlane.f32.xlu0 %v159
    %v161 = vpop.xlane.xlu0 %160
    %v162 = vsel %vm37, %v128, 0.0
    %163 = vadd.xlane.f32.xlu0 %v162
    %v164 = vpop.xlane.xlu0 %163
    %v165 = vsel %vm37, %v129, 0.0
    %166 = vadd.xlane.f32.xlu0 %v165
    %v167 = vpop.xlane.xlu0 %166
    %v168 = vsel %vm37, %v130, 0.0
    %169 = vadd.xlane.f32.xlu0 %v168
    %v170 = vpop.xlane.xlu0 %169
    %v171 = vsel %vm37, %v131, 0.0
    %172 = vadd.xlane.f32.xlu0 %v171
    %v173 = vpop.xlane.xlu0 %172
    %v174 = vsel %vm37, %v132, 0.0
    %175 = vadd.xlane.f32.xlu0 %v174
    %v176 = vpop.xlane.xlu0 %175
    %v177 = vsel %vm37, %v133, 0.0
    %178 = vadd.xlane.f32.xlu0 %v177
    %v179 = vpop.xlane.xlu0 %178
    %v180 = vsel %vm37, %v134, 0.0
    %181 = vadd.xlane.f32.xlu0 %v180
    %v182 = vpop.xlane.xlu0 %181
    %v183 = vmul.f32 %v137, %v86
    %v184 = vmul.f32 %v140, %v86
    %v185 = vmul.f32 %v143, %v86
    %v186 = vmul.f32 %v146, %v86
    %v187 = vmul.f32 %v149, %v86
    %v188 = vmul.f32 %v152, %v86
    %v189 = vmul.f32 %v155, %v86
    %v190 = vmul.f32 %v158, %v86
    %v191 = vmul.f32 %v161, %v86
    %v192 = vmul.f32 %v164, %v86
    %v193 = vmul.f32 %v167, %v86
    %v194 = vmul.f32 %v170, %v86
    %v195 = vmul.f32 %v173, %v86
    %v196 = vmul.f32 %v176, %v86
    %v197 = vmul.f32 %v179, %v86
    %v198 = vmul.f32 %v182, %v86
    %v199 = vadd.f32 %v183, 1e-05
    %v200 = vadd.f32 %v184, 1e-05
    %v201 = vadd.f32 %v185, 1e-05
    %v202 = vadd.f32 %v186, 1e-05
    %v203 = vadd.f32 %v187, 1e-05
    %v204 = vadd.f32 %v188, 1e-05
    %v205 = vadd.f32 %v189, 1e-05
    %v206 = vadd.f32 %v190, 1e-05
    %v207 = vadd.f32 %v191, 1e-05
    %v208 = vadd.f32 %v192, 1e-05
    %v209 = vadd.f32 %v193, 1e-05
    %v210 = vadd.f32 %v194, 1e-05
    %v211 = vadd.f32 %v195, 1e-05
    %v212 = vadd.f32 %v196, 1e-05
    %v213 = vadd.f32 %v197, 1e-05
    %v214 = vadd.f32 %v198, 1e-05
    %v215 = vrsqrt.pop %v199
    %v216 = vrsqrt.pop %v200
    %v217 = vrsqrt.pop %v201
    %v218 = vrsqrt.pop %v202
    %v219 = vrsqrt.pop %v203
    %v220 = vrsqrt.pop %v204
    %v221 = vrsqrt.pop %v205
    %v222 = vrsqrt.pop %v206
    %v223 = vrsqrt.pop %v207
    %v224 = vrsqrt.pop %v208
    %v225 = vrsqrt.pop %v209
    %v226 = vrsqrt.pop %v210
    %v227 = vrsqrt.pop %v211
    %v228 = vrsqrt.pop %v212
    %v229 = vrsqrt.pop %v213
    %v230 = vrsqrt.pop %v214
    %v231 = vld [vmem:[%s1] sm:$0x1]
    %v233 = vlaneseq
    %v234 = vshrl.u32 %v233, 7
    %v235 = vsub.s32 0, %v234
    %v236 = vrot.slane %v231, %v235
    %v238 = vmul.f32 %v215, %v236
    %v239 = vmul.f32 %v216, %v236
    %v240 = vmul.f32 %v217, %v236
    %v241 = vmul.f32 %v218, %v236
    %v242 = vmul.f32 %v219, %v236
    %v243 = vmul.f32 %v220, %v236
    %v244 = vmul.f32 %v221, %v236
    %v245 = vmul.f32 %v222, %v236
    %v246 = vmul.f32 %v223, %v236
    %v247 = vmul.f32 %v224, %v236
    %v248 = vmul.f32 %v225, %v236
    %v249 = vmul.f32 %v226, %v236
    %v250 = vmul.f32 %v227, %v236
    %v251 = vmul.f32 %v228, %v236
    %v252 = vmul.f32 %v229, %v236
    %v253 = vmul.f32 %v230, %v236
    %v254 = vmul.f32 %v103, %v238
    %v255 = vmul.f32 %v104, %v239
    %v256 = vmul.f32 %v105, %v240
    %v257 = vmul.f32 %v106, %v241
    %v258 = vmul.f32 %v107, %v242
    %v259 = vmul.f32 %v108, %v243
    %v260 = vmul.f32 %v109, %v244
    %v261 = vmul.f32 %v110, %v245
    %v262 = vmul.f32 %v111, %v246
    %v263 = vmul.f32 %v112, %v247
    %v264 = vmul.f32 %v113, %v248
    %v265 = vmul.f32 %v114, %v249
    %v266 = vmul.f32 %v115, %v250
    %v267 = vmul.f32 %v116, %v251
    %v268 = vmul.f32 %v117, %v252
    %v269 = vmul.f32 %v118, %v253
    %v270 = vld [vmem:[%s2] sm:$0x1]
    %v272 = vlaneseq
    %v273 = vshrl.u32 %v272, 7
    %v274 = vsub.s32 0, %v273
    %v275 = vrot.slane %v270, %v274
    %v277 = vadd.f32 %v254, %v275
    %v278 = vadd.f32 %v255, %v275
    %v279 = vadd.f32 %v256, %v275
    %v280 = vadd.f32 %v257, %v275
    %v281 = vadd.f32 %v258, %v275
    %v282 = vadd.f32 %v259, %v275
    %v283 = vadd.f32 %v260, %v275
    %v284 = vadd.f32 %v261, %v275
    %v285 = vadd.f32 %v262, %v275
    %v286 = vadd.f32 %v263, %v275
    %v287 = vadd.f32 %v264, %v275
    %v288 = vadd.f32 %v265, %v275
    %v289 = vadd.f32 %v266, %v275
    %v290 = vadd.f32 %v267, %v275
    %v291 = vadd.f32 %v268, %v275
    %v292 = vadd.f32 %v269, %v275
    %293 = vst.msk [vmem:[#allocation2] sm:$0xff] %vm37, %v277
    %294 = vst.msk [vmem:[#allocation2 + $0x8] sm:$0xff] %vm37, %v278
    %295 = vst.msk [vmem:[#allocation2 + $0x10] sm:$0xff] %vm37, %v279
    %296 = vst.msk [vmem:[#allocation2 + $0x18] sm:$0xff] %vm37, %v280
    %297 = vst.msk [vmem:[#allocation2 + $0x20] sm:$0xff] %vm37, %v281
    %298 = vst.msk [vmem:[#allocation2 + $0x28] sm:$0xff] %vm37, %v282
    %299 = vst.msk [vmem:[#allocation2 + $0x30] sm:$0xff] %vm37, %v283
    %300 = vst.msk [vmem:[#allocation2 + $0x38] sm:$0xff] %vm37, %v284
    %301 = vst.msk [vmem:[#allocation2 + $0x40] sm:$0xff] %vm37, %v285
    %302 = vst.msk [vmem:[#allocation2 + $0x48] sm:$0xff] %vm37, %v286
    %303 = vst.msk [vmem:[#allocation2 + $0x50] sm:$0xff] %vm37, %v287
    %304 = vst.msk [vmem:[#allocation2 + $0x58] sm:$0xff] %vm37, %v288
    %305 = vst.msk [vmem:[#allocation2 + $0x60] sm:$0xff] %vm37, %v289
    %306 = vst.msk [vmem:[#allocation2 + $0x68] sm:$0xff] %vm37, %v290
    %307 = vst.msk [vmem:[#allocation2 + $0x70] sm:$0xff] %vm37, %v291
    %308 = vst.msk [vmem:[#allocation2 + $0x78] sm:$0xff] %vm37, %v292
  $region21: #{patch_merging.1} parent=0 // pred_fallthru
    _
  %v309 = vld [vmem:[#allocation2] sm:$0xff]
  %v310 = vld [vmem:[#allocation2 + $0x8] sm:$0xff]
  %v311 = vld [vmem:[#allocation2 + $0x10] sm:$0xff]
  %v312 = vld [vmem:[#allocation2 + $0x18] sm:$0xff]
  %v313 = vld [vmem:[#allocation2 + $0x20] sm:$0xff]
  %v314 = vld [vmem:[#allocation2 + $0x28] sm:$0xff]
  %v315 = vld [vmem:[#allocation2 + $0x30] sm:$0xff]
  %v316 = vld [vmem:[#allocation2 + $0x38] sm:$0xff]
  %v317 = vld [vmem:[#allocation2 + $0x40] sm:$0xff]
  %v318 = vld [vmem:[#allocation2 + $0x48] sm:$0xff]
  %v319 = vld [vmem:[#allocation2 + $0x50] sm:$0xff]
  %v320 = vld [vmem:[#allocation2 + $0x58] sm:$0xff]
  %v321 = vld [vmem:[#allocation2 + $0x60] sm:$0xff]
  %v322 = vld [vmem:[#allocation2 + $0x68] sm:$0xff]
  %v323 = vld [vmem:[#allocation2 + $0x70] sm:$0xff]
  %v324 = vld [vmem:[#allocation2 + $0x78] sm:$0xff]
  %v325 = vld [vmem:[%s3] sm:$0xff]
  %v326 = vld [vmem:[%s3 + $0x8] sm:$0xff]
  %vm327 = vcmask 130048
  %v329 = vsel %vm327, %v309, 0
  %v332 = vsel %vm327, %v310, 0
  %v335 = vsel %vm327, %v311, 0
  %v338 = vsel %vm327, %v312, 0
  %v341 = vsel %vm327, %v313, 0
  %v344 = vsel %vm327, %v314, 0
  %v347 = vsel %vm327, %v315, 0
  %v350 = vsel %vm327, %v316, 0
  %v353 = vsel %vm327, %v317, 0
  %v356 = vsel %vm327, %v318, 0
  %v359 = vsel %vm327, %v319, 0
  %v362 = vsel %vm327, %v320, 0
  %v365 = vsel %vm327, %v321, 0
  %v368 = vsel %vm327, %v322, 0
  %v371 = vsel %vm327, %v323, 0
  %v374 = vsel %vm327, %v324, 0
  %376 = vmatprep.subr.mxu0 0.0
  %377 = vmatpush1.msra.mxu0 %v325
  %378 = vmatprep.subr.mxu0 0.0
  %379 = vmatpush1.msra.mxu0 %v326
  %380 = vmatprep.subr.mxu0 0.0
  %381 = vmatpush1.msra.mxu0 0.0
  %382 = vmatprep.subr.mxu0 0.0
  %383 = vmatpush1.msra.mxu0 0.0
  %384 = vmatprep.subr.mxu0 0.0
  %385 = vmatpush1.msra.mxu0 0.0
  %386 = vmatprep.subr.mxu0 0.0
  %387 = vmatpush1.msra.mxu0 0.0
  %388 = vmatprep.subr.mxu0 0.0
  %389 = vmatpush1.msra.mxu0 0.0
  %390 = vmatprep.subr.mxu0 0.0
  %391 = vmatpush1.msra.mxu0 0.0
  %392 = vmatprep.subr.mxu0 0.0
  %393 = vmatpush1.msra.mxu0 0.0
  %394 = vmatprep.subr.mxu0 0.0
  %395 = vmatpush1.msra.mxu0 0.0
  %396 = vmatprep.subr.mxu0 0.0
  %397 = vmatpush1.msra.mxu0 0.0
  %398 = vmatprep.subr.mxu0 0.0
  %399 = vmatpush1.msra.mxu0 0.0
  %400 = vmatprep.subr.mxu0 0.0
  %401 = vmatpush1.msra.mxu0 0.0
  %402 = vmatprep.subr.mxu0 0.0
  %403 = vmatpush1.msra.mxu0 0.0
  %404 = vmatprep.subr.mxu0 0.0
  %405 = vmatpush1.msra.mxu0 0.0
  %406 = vmatprep.subr.mxu0 0.0
  %407 = vmatpush1.msra.mxu0 0.0
  %408 = vmatprep.subr.mxu0 0.0
  %409 = vmatpush1.msra.mxu0 0.0
  %410 = vmatprep.subr.mxu0 0.0
  %411 = vmatpush1.msra.mxu0 0.0
  %412 = vmatprep.subr.mxu0 0.0
  %413 = vmatpush1.msra.mxu0 0.0
  %414 = vmatprep.subr.mxu0 0.0
  %415 = vmatpush1.msra.mxu0 0.0
  %416 = vmatprep.subr.mxu0 0.0
  %417 = vmatpush1.msra.mxu0 0.0
  %418 = vmatprep.subr.mxu0 0.0
  %419 = vmatpush1.msra.mxu0 0.0
  %420 = vmatprep.subr.mxu0 0.0
  %421 = vmatpush1.msra.mxu0 0.0
  %422 = vmatprep.subr.mxu0 0.0
  %423 = vmatpush1.msra.mxu0 0.0
  %424 = vmatprep.subr.mxu0 0.0
  %425 = vmatpush1.msra.mxu0 0.0
  %426 = vmatprep.subr.mxu0 0.0
  %427 = vmatpush1.msra.mxu0 0.0
  %428 = vmatprep.subr.mxu0 0.0
  %429 = vmatpush1.msra.mxu0 0.0
  %430 = vmatprep.subr.mxu0 0.0
  %431 = vmatpush1.msra.mxu0 0.0
  %432 = vmatprep.subr.mxu0 0.0
  %433 = vmatpush1.msra.mxu0 0.0
  %434 = vmatprep.subr.mxu0 0.0
  %435 = vmatpush1.msra.mxu0 0.0
  %436 = vmatprep.subr.mxu0 0.0
  %437 = vmatpush1.msra.mxu0 0.0
  %438 = vmatprep.subr.mxu0 0.0
  %439 = vmatpush1.msra.mxu0 0.0
  %440 = vmatprep.mubr.f32.mxu0 0.0
  %441 = vmatmul.mubr.f32.gmra.mrb[0].mxu0 %v329
  %v442 = vpop.f32.mrb[0].mxu0
  %v443 = vadd.f32 0.0, %v442
  %v444 = vpop.f32.mrb[0].mxu0
  %445 = vmatprep.mubr.f32.mxu0 0.0
  %446 = vmatmul.mubr.f32.gmra.mrb[0].mxu0 %v332
  %v447 = vpop.f32.mrb[0].mxu0
  %v448 = vadd.f32 0.0, %v447
  %v449 = vpop.f32.mrb[0].mxu0
  %450 = vmatprep.mubr.f32.mxu0 0.0
  %451 = vmatmul.mubr.f32.gmra.mrb[0].mxu0 %v335
  %v452 = vpop.f32.mrb[0].mxu0
  %v453 = vadd.f32 0.0, %v452
  %v454 = vpop.f32.mrb[0].mxu0
  %455 = vmatprep.mubr.f32.mxu0 0.0
  %456 = vmatmul.mubr.f32.gmra.mrb[0].mxu0 %v338
  %v457 = vpop.f32.mrb[0].mxu0
  %v458 = vadd.f32 0.0, %v457
  %v459 = vpop.f32.mrb[0].mxu0
  %460 = vmatprep.mubr.f32.mxu0 0.0
  %461 = vmatmul.mubr.f32.gmra.mrb[0].mxu0 %v341
  %v462 = vpop.f32.mrb[0].mxu0
  %v463 = vadd.f32 0.0, %v462
  %v464 = vpop.f32.mrb[0].mxu0
  %465 = vmatprep.mubr.f32.mxu0 0.0
  %466 = vmatmul.mubr.f32.gmra.mrb[0].mxu0 %v344
  %v467 = vpop.f32.mrb[0].mxu0
  %v468 = vadd.f32 0.0, %v467
  %v469 = vpop.f32.mrb[0].mxu0
  %470 = vmatprep.mubr.f32.mxu0 0.0
  %471 = vmatmul.mubr.f32.gmra.mrb[0].mxu0 %v347
  %v472 = vpop.f32.mrb[0].mxu0
  %v473 = vadd.f32 0.0, %v472
  %v474 = vpop.f32.mrb[0].mxu0
  %475 = vmatprep.mubr.f32.mxu0 0.0
  %476 = vmatmul.mubr.f32.gmra.mrb[0].mxu0 %v350
  %v477 = vpop.f32.mrb[0].mxu0
  %v478 = vadd.f32 0.0, %v477
  %v479 = vpop.f32.mrb[0].mxu0
  %480 = vmatprep.mubr.f32.mxu0 0.0
  %481 = vmatmul.mubr.f32.gmra.mrb[0].mxu0 %v353
  %v482 = vpop.f32.mrb[0].mxu0
  %v483 = vadd.f32 0.0, %v482
  %v484 = vpop.f32.mrb[0].mxu0
  %485 = vmatprep.mubr.f32.mxu0 0.0
  %486 = vmatmul.mubr.f32.gmra.mrb[0].mxu0 %v356
  %v487 = vpop.f32.mrb[0].mxu0
  %v488 = vadd.f32 0.0, %v487
  %v489 = vpop.f32.mrb[0].mxu0
  %490 = vmatprep.mubr.f32.mxu0 0.0
  %491 = vmatmul.mubr.f32.gmra.mrb[0].mxu0 %v359
  %v492 = vpop.f32.mrb[0].mxu0
  %v493 = vadd.f32 0.0, %v492
  %v494 = vpop.f32.mrb[0].mxu0
  %495 = vmatprep.mubr.f32.mxu0 0.0
  %496 = vmatmul.mubr.f32.gmra.mrb[0].mxu0 %v362
  %v497 = vpop.f32.mrb[0].mxu0
  %v498 = vadd.f32 0.0, %v497
  %v499 = vpop.f32.mrb[0].mxu0
  %500 = vmatprep.mubr.f32.mxu0 0.0
  %501 = vmatmul.mubr.f32.gmra.mrb[0].mxu0 %v365
  %v502 = vpop.f32.mrb[0].mxu0
  %v503 = vadd.f32 0.0, %v502
  %v504 = vpop.f32.mrb[0].mxu0
  %505 = vmatprep.mubr.f32.mxu0 0.0
  %506 = vmatmul.mubr.f32.gmra.mrb[0].mxu0 %v368
  %v507 = vpop.f32.mrb[0].mxu0
  %v508 = vadd.f32 0.0, %v507
  %v509 = vpop.f32.mrb[0].mxu0
  %510 = vmatprep.mubr.f32.mxu0 0.0
  %511 = vmatmul.mubr.f32.gmra.mrb[0].mxu0 %v371
  %v512 = vpop.f32.mrb[0].mxu0
  %v513 = vadd.f32 0.0, %v512
  %v514 = vpop.f32.mrb[0].mxu0
  %515 = vmatprep.mubr.f32.mxu0 0.0
  %516 = vmatmul.mubr.f32.gmra.mrb[0].mxu0 %v374
  %v517 = vpop.f32.mrb[0].mxu0
  %v518 = vadd.f32 0.0, %v517
  %v519 = vpop.f32.mrb[0].mxu0
  %520 = vdwg.mxu0
  %521 = vst [vmem:[%s4] sm:$0xff] %v443
  %522 = vst [vmem:[%s4 + $0x8] sm:$0xff] %v448
  %523 = vst [vmem:[%s4 + $0x10] sm:$0xff] %v453
  %524 = vst [vmem:[%s4 + $0x18] sm:$0xff] %v458
  %525 = vst [vmem:[%s4 + $0x20] sm:$0xff] %v463
  %526 = vst [vmem:[%s4 + $0x28] sm:$0xff] %v468
  %527 = vst [vmem:[%s4 + $0x30] sm:$0xff] %v473
  %528 = vst [vmem:[%s4 + $0x38] sm:$0xff] %v478
  %529 = vst [vmem:[%s4 + $0x40] sm:$0xff] %v483
  %530 = vst [vmem:[%s4 + $0x48] sm:$0xff] %v488
  %531 = vst [vmem:[%s4 + $0x50] sm:$0xff] %v493
  %532 = vst [vmem:[%s4 + $0x58] sm:$0xff] %v498
  %533 = vst [vmem:[%s4 + $0x60] sm:$0xff] %v503
  %534 = vst [vmem:[%s4 + $0x68] sm:$0xff] %v508
  %535 = vst [vmem:[%s4 + $0x70] sm:$0xff] %v513
  %536 = vst [vmem:[%s4 + $0x78] sm:$0xff] %v518
  // Predicated region
  $region22: #{patch_merging.1} parent=0 // pred_check
    _
  $region23: #{patch_merging.1} parent=0 // pred_check_branch
    %538 = sbr.rel (0) target = $region25
  $region24: #{patch_merging.1} parent=0 // pred_region
    _
  $region25: #{patch_merging.1} parent=0 // pred_fallthru
    _
  // Predicated region
  $region26: #{patch_merging.1} parent=0 // pred_check
    _
  $region27: #{patch_merging.1} parent=0 // pred_check_branch
    %540 = sbr.rel (0) target = $region29
  $region28: #{patch_merging.1} parent=0 // pred_region
    _
  $region29: #{patch_merging.1} parent=0 // pred_fallthru
    _

</llo_original>
